<compile_context>
chip_gen: v7x
topology: tpu7x:2x2x1
jax: 0.10.0
libtpu: 0.0.40
codegen_flags: <defaults>
</compile_context>

<pallas_src>
import functools

import jax
import jax.numpy as jnp
from jax import lax
from jax.experimental import pallas as pl
from jax.experimental.pallas import tpu as pltpu


# Contract the last dims of both operands: result = A @ B^T  (lane-dense result).
_NT_DIMS = (((1,), (1,)), ((), ()))


def mlp_kernel(x_ref, w1_ref, b1_ref, w2_ref, b2_ref, w3_ref, b3_ref, o_ref,
               *, matmul_dtype):
    # x_ref: (TB, 4) native batch-major tile.  All intermediates are (features, TB):
    # fully lane-dense vregs, unmasked stores for the (3, TB) output tile.
    x = x_ref[...].astype(matmul_dtype)                            # (TB, 4)

    # fc1 + ReLU:  (50, 4) . (TB, 4)^T -> (50, TB)
    h1 = lax.dot_general(w1_ref[...], x, _NT_DIMS,
                         preferred_element_type=jnp.float32)
    h1 = jnp.maximum(h1 + b1_ref[...], 0.0).astype(matmul_dtype)   # (50, TB)

    # fc2 + ReLU:  (50, 50) @ (50, TB) -> (50, TB)
    h2 = jnp.dot(w2_ref[...], h1, preferred_element_type=jnp.float32)
    h2 = jnp.maximum(h2 + b2_ref[...], 0.0).astype(matmul_dtype)   # (50, TB)

    # output layer:  (3, 50) @ (50, TB) -> (3, TB)
    logits = jnp.dot(w3_ref[...], h2,
                     preferred_element_type=jnp.float32) + b3_ref[...]

    # log_softmax over the class axis (axis 0 here == PyTorch dim=1), numerically stable.
    m = jnp.max(logits, axis=0, keepdims=True)                     # (1, TB)
    shifted = logits - m
    lse = jnp.log(jnp.sum(jnp.exp(shifted), axis=0, keepdims=True))
    o_ref[...] = (shifted - lse).astype(o_ref.dtype)


def _round_up(n, m):
    return ((n + m - 1) // m) * m


def net_forward(x, params, *, tb=8192, matmul_dtype=jnp.float32):
    """x: (B, 4) float32 -> (B, 3) float32 log-probabilities (Net.forward semantics)."""
    B, F = x.shape
    w1, b1 = params["w1"], params["b1"]
    w2, b2 = params["w2"], params["b2"]
    w3, b3 = params["w3"], params["b3"]
    H1, H2, C = w1.shape[0], w2.shape[0], w3.shape[0]

    # Pre-cast weights once here (VMEM-resident in the kernel via constant index_maps);
    # biases stay f32 — they are added to the f32 matmul accumulators.
    w1m, w2m, w3m = (w.astype(matmul_dtype) for w in (w1, w2, w3))

    # Batch tile: multiple of 128 lanes; large to amortize the ~0.35us per-grid-step
    # overhead; at least 2 tiles when B > 128 so v7x's two TensorCores both get work.
    tb = max(128, _round_up(int(tb), 128))
    if B <= 128:
        tb_eff = B                                  # single tile == full array extents
    else:
        tb_eff = min(tb, _round_up(pl.cdiv(B, 2), 128))
    n_tiles = pl.cdiv(B, tb_eff)
    Bp = n_tiles * tb_eff                           # padded extent of the kernel output only

    param_bytes = sum(int(a.size) * a.dtype.itemsize
                      for a in (w1m, b1, w2m, b2, w3m, b3))
    cost = pl.CostEstimate(
        flops=2 * B * (F * H1 + H1 * H2 + H2 * C),
        transcendentals=B * (C + 1),                # C exps + 1 log per sample
        bytes_accessed=B * F * x.dtype.itemsize + Bp * C * 4 + param_bytes,
    )

    const = lambda i: (0, 0)
    out = pl.pallas_call(
        functools.partial(mlp_kernel, matmul_dtype=matmul_dtype),
        out_shape=jax.ShapeDtypeStruct((C, Bp), jnp.float32),
        grid=(n_tiles,),
        in_specs=[
            pl.BlockSpec((tb_eff, F), lambda i: (i, 0)),   # x tile: pipelined, native layout
            pl.BlockSpec((H1, F), const),                  # weights / biases: resident
            pl.BlockSpec((H1, 1), const),
            pl.BlockSpec((H2, H1), const),
            pl.BlockSpec((H2, 1), const),
            pl.BlockSpec((C, H2), const),
            pl.BlockSpec((C, 1), const),
        ],
        out_specs=pl.BlockSpec((C, tb_eff), lambda i: (0, i)),
        compiler_params=pltpu.CompilerParams(
            dimension_semantics=("parallel",),             # shard batch tiles across TCs
        ),
        cost_estimate=cost,
    )(x, w1m, b1, w2m, b2, w3m, b3)

    # Only remaining wrapper op: drop padded columns and transpose (3, B) -> (B, 3).
    return jnp.transpose(out[:, :B])


def init_params(key):
    """Deterministic init mimicking PyTorch Linear default (U[-1/sqrt(fan_in), +...]).

    Weights stored PyTorch-native as (out_features, in_features); biases as (out, 1) so
    they broadcast along the lane (batch) axis inside the kernel.
    """
    def linear(key, fan_in, fan_out):
        kw, kb = jax.random.split(key)
        bound = 1.0 / jnp.sqrt(fan_in)
        w = jax.random.uniform(kw, (fan_out, fan_in), jnp.float32, -bound, bound)
        b = jax.random.uniform(kb, (fan_out, 1), jnp.float32, -bound, bound)
        return w, b

    k1, k2, k3 = jax.random.split(key, 3)
    w1, b1 = linear(k1, 4, 50)
    w2, b2 = linear(k2, 50, 50)
    w3, b3 = linear(k3, 50, 3)
    return {"w1": w1, "b1": b1, "w2": w2, "b2": b2, "w3": w3, "b3": b3}


def reference_forward(x, p):
    """Plain-JAX reference (PyTorch semantics) for correctness checks."""
    h1 = jnp.maximum(x @ p["w1"].T + p["b1"][:, 0], 0.0)
    h2 = jnp.maximum(h1 @ p["w2"].T + p["b2"][:, 0], 0.0)
    logits = h2 @ p["w3"].T + p["b3"][:, 0]
    return jax.nn.log_softmax(logits, axis=1)


if __name__ == "__main__":
    key = jax.random.PRNGKey(0)
    kx, kp = jax.random.split(key)
    params = init_params(kp)

    # f32 path (exact): small single-tile case, a 2-tile case with a ragged last x block,
    # and a non-multiple-of-128 user tb (rounded up to 384 -> 3 tiles).
    for B, tb in ((8, 8192), (300, 8192), (1000, 300)):
        x = jax.random.normal(jax.random.fold_in(kx, B), (B, 4), jnp.float32)
        out = jax.block_until_ready(net_forward(x, params, tb=tb))
        ref = reference_forward(x, params)
        assert out.shape == (B, 3)
        err = float(jnp.max(jnp.abs(out - ref)))
        assert jnp.allclose(out, ref, atol=1e-4, rtol=1e-4), (
            f"f32 mismatch vs reference at B={B}: max|diff|={err}")

    # bf16 MXU-operand path (recommended on v6e/v7x): loose tolerance — expected
    # precision loss only, not a bug.
    xb = jax.random.normal(jax.random.fold_in(kx, 77), (300, 4), jnp.float32)
    outb = jax.block_until_ready(
        net_forward(xb, params, matmul_dtype=jnp.bfloat16))
    refb = reference_forward(xb, params)
    assert outb.shape == (300, 3)
    assert bool(jnp.all(jnp.isfinite(outb)))
    assert jnp.allclose(outb, refb, atol=0.15, rtol=0.05), (
        f"bf16 path too far from reference: "
        f"max|diff|={float(jnp.max(jnp.abs(outb - refb)))}")

    print("KERNEL_OK")
</pallas_src>

<mosaic_0001>
module attributes {stable_mosaic.version = 11 : i64} {
  func.func @mlp_kernel(%arg0: i32, %arg1: memref<8x4xf32, #tpu.memory_space<vmem>>, %arg2: memref<50x4xf32, #tpu.memory_space<vmem>>, %arg3: memref<50x1xf32, #tpu.memory_space<vmem>>, %arg4: memref<50x50xf32, #tpu.memory_space<vmem>>, %arg5: memref<50x1xf32, #tpu.memory_space<vmem>>, %arg6: memref<3x50xf32, #tpu.memory_space<vmem>>, %arg7: memref<3x1xf32, #tpu.memory_space<vmem>>, %arg8: memref<3x8xf32, #tpu.memory_space<vmem>>) attributes {dimension_semantics = [#tpu.dimension_semantics<parallel>], iteration_bounds = array<i64: 1>, scalar_prefetch = 0 : i64, scratch_operands = 0 : i64, tpu.core_type = #tpu.core_type<tc>, window_params = [{transform_indices = @transform_0, window_bounds = array<i64: 8, 4>}, {pipeline_mode = #tpu.pipeline_mode<synchronous>, transform_indices = @transform_1, window_bounds = array<i64: 50, 4>}, {pipeline_mode = #tpu.pipeline_mode<synchronous>, transform_indices = @transform_2, window_bounds = array<i64: 50, 1>}, {pipeline_mode = #tpu.pipeline_mode<synchronous>, transform_indices = @transform_3, window_bounds = array<i64: 50, 50>}, {pipeline_mode = #tpu.pipeline_mode<synchronous>, transform_indices = @transform_4, window_bounds = array<i64: 50, 1>}, {pipeline_mode = #tpu.pipeline_mode<synchronous>, transform_indices = @transform_5, window_bounds = array<i64: 3, 50>}, {pipeline_mode = #tpu.pipeline_mode<synchronous>, transform_indices = @transform_6, window_bounds = array<i64: 3, 1>}, {transform_indices = @transform_7, window_bounds = array<i64: 3, 8>}]} {
    %c0 = arith.constant 0 : index
    %c0_0 = arith.constant 0 : index
    %0 = vector.load %arg1[%c0, %c0_0] : memref<8x4xf32, #tpu.memory_space<vmem>>, vector<8x4xf32>
    %c0_1 = arith.constant 0 : index
    %c0_2 = arith.constant 0 : index
    %1 = vector.load %arg2[%c0_1, %c0_2] : memref<50x4xf32, #tpu.memory_space<vmem>>, vector<50x4xf32>
    %cst = arith.constant dense<0.000000e+00> : vector<50x8xf32>
    %2 = tpu.matmul %1, %0, %cst {dimension_numbers = #tpu.dot_dimension_numbers<[1], [1], [0], [0], [0, 0, 1, 0], [], []>} : vector<50x4xf32>, vector<8x4xf32>, vector<50x8xf32> -> vector<50x8xf32>
    %c0_3 = arith.constant 0 : index
    %c0_4 = arith.constant 0 : index
    %3 = vector.load %arg3[%c0_3, %c0_4] : memref<50x1xf32, #tpu.memory_space<vmem>>, vector<50x1xf32>
    %4 = vector.broadcast %3 : vector<50x1xf32> to vector<50x8xf32>
    %5 = arith.addf %2, %4 : vector<50x8xf32>
    %cst_5 = arith.constant 0.000000e+00 : f32
    %6 = vector.broadcast %cst_5 : f32 to vector<50x8xf32>
    %7 = arith.maximumf %5, %6 : vector<50x8xf32>
    %c0_6 = arith.constant 0 : index
    %c0_7 = arith.constant 0 : index
    %8 = vector.load %arg4[%c0_6, %c0_7] : memref<50x50xf32, #tpu.memory_space<vmem>>, vector<50x50xf32>
    %cst_8 = arith.constant dense<0.000000e+00> : vector<50x8xf32>
    %9 = tpu.matmul %8, %7, %cst_8 {dimension_numbers = #tpu.dot_dimension_numbers<[1], [0], [0], [1], [0, 0, 1, 1], [], []>} : vector<50x50xf32>, vector<50x8xf32>, vector<50x8xf32> -> vector<50x8xf32>
    %c0_9 = arith.constant 0 : index
    %c0_10 = arith.constant 0 : index
    %10 = vector.load %arg5[%c0_9, %c0_10] : memref<50x1xf32, #tpu.memory_space<vmem>>, vector<50x1xf32>
    %11 = vector.broadcast %10 : vector<50x1xf32> to vector<50x8xf32>
    %12 = arith.addf %9, %11 : vector<50x8xf32>
    %cst_11 = arith.constant 0.000000e+00 : f32
    %13 = vector.broadcast %cst_11 : f32 to vector<50x8xf32>
    %14 = arith.maximumf %12, %13 : vector<50x8xf32>
    %c0_12 = arith.constant 0 : index
    %c0_13 = arith.constant 0 : index
    %15 = vector.load %arg6[%c0_12, %c0_13] : memref<3x50xf32, #tpu.memory_space<vmem>>, vector<3x50xf32>
    %cst_14 = arith.constant dense<0.000000e+00> : vector<3x8xf32>
    %16 = tpu.matmul %15, %14, %cst_14 {dimension_numbers = #tpu.dot_dimension_numbers<[1], [0], [0], [1], [0, 0, 1, 1], [], []>} : vector<3x50xf32>, vector<50x8xf32>, vector<3x8xf32> -> vector<3x8xf32>
    %c0_15 = arith.constant 0 : index
    %c0_16 = arith.constant 0 : index
    %17 = vector.load %arg7[%c0_15, %c0_16] : memref<3x1xf32, #tpu.memory_space<vmem>>, vector<3x1xf32>
    %18 = vector.broadcast %17 : vector<3x1xf32> to vector<3x8xf32>
    %19 = arith.addf %16, %18 : vector<3x8xf32>
    %cst_17 = arith.constant dense<0xFF800000> : vector<8xf32>
    %20 = vector.multi_reduction <maximumf>, %19, %cst_17 [0] : vector<3x8xf32> to vector<8xf32>
    %21 = vector.shape_cast %20 : vector<8xf32> to vector<1x8xf32>
    %22 = vector.broadcast %21 : vector<1x8xf32> to vector<3x8xf32>
    %23 = arith.subf %19, %22 : vector<3x8xf32>
    %24 = math.exp %23 : vector<3x8xf32>
    %cst_18 = arith.constant dense<0.000000e+00> : vector<8xf32>
    %25 = vector.multi_reduction <add>, %24, %cst_18 [0] : vector<3x8xf32> to vector<8xf32>
    %26 = vector.shape_cast %25 : vector<8xf32> to vector<1x8xf32>
    %27 = math.log %26 : vector<1x8xf32>
    %28 = vector.broadcast %27 : vector<1x8xf32> to vector<3x8xf32>
    %29 = arith.subf %23, %28 : vector<3x8xf32>
    %c0_19 = arith.constant 0 : index
    %c0_20 = arith.constant 0 : index
    %30 = vector.load %arg8[%c0_19, %c0_20] : memref<3x8xf32, #tpu.memory_space<vmem>>, vector<3x8xf32>
    tpu.vector_store %arg8[%c0_19, %c0_20], %29 {strides = array<i32>} : memref<3x8xf32, #tpu.memory_space<vmem>>, vector<3x8xf32>,
    return
  }
  func.func @transform_0(%arg0: i32) -> (i32, i32) {
    %c0_i32 = arith.constant 0 : i32
    %c0_i32_0 = arith.constant 0 : i32
    return %arg0, %c0_i32 : i32, i32
  }
  func.func @transform_1(%arg0: i32) -> (i32, i32) {
    %c0_i32 = arith.constant 0 : i32
    %c0_i32_0 = arith.constant 0 : i32
    %c0_i32_1 = arith.constant 0 : i32
    return %c0_i32, %c0_i32_0 : i32, i32
  }
  func.func @transform_2(%arg0: i32) -> (i32, i32) {
    %c0_i32 = arith.constant 0 : i32
    %c0_i32_0 = arith.constant 0 : i32
    %c0_i32_1 = arith.constant 0 : i32
    return %c0_i32, %c0_i32_0 : i32, i32
  }
  func.func @transform_3(%arg0: i32) -> (i32, i32) {
    %c0_i32 = arith.constant 0 : i32
    %c0_i32_0 = arith.constant 0 : i32
    %c0_i32_1 = arith.constant 0 : i32
    return %c0_i32, %c0_i32_0 : i32, i32
  }
  func.func @transform_4(%arg0: i32) -> (i32, i32) {
    %c0_i32 = arith.constant 0 : i32
    %c0_i32_0 = arith.constant 0 : i32
    %c0_i32_1 = arith.constant 0 : i32
    return %c0_i32, %c0_i32_0 : i32, i32
  }
  func.func @transform_5(%arg0: i32) -> (i32, i32) {
    %c0_i32 = arith.constant 0 : i32
    %c0_i32_0 = arith.constant 0 : i32
    %c0_i32_1 = arith.constant 0 : i32
    return %c0_i32, %c0_i32_0 : i32, i32
  }
  func.func @transform_6(%arg0: i32) -> (i32, i32) {
    %c0_i32 = arith.constant 0 : i32
    %c0_i32_0 = arith.constant 0 : i32
    %c0_i32_1 = arith.constant 0 : i32
    return %c0_i32, %c0_i32_0 : i32, i32
  }
  func.func @transform_7(%arg0: i32) -> (i32, i32) {
    %c0_i32 = arith.constant 0 : i32
    %c0_i32_0 = arith.constant 0 : i32
    return %c0_i32, %arg0 : i32, i32
  }
}

</mosaic_0001>

<llo_original>
// kernel: tpu_custom_call.1
$region0: #{tpu_custom_call.1}
  #allocation0 [shape = 'u32[]', space=smem, size = 0x4, offset = 0x4, fixed_abs, tag = 'smem constant byte address 0x4 - core index']
  #allocation1 [shape = 'u32[144,128]{1,0:T(1,128)}', space=vmem, size = 0x12000, scoped, tag = 'internal scratch']
  %s0 = inlined_call_operand.vmem [shape: f32[8,4], index: 0, kind: input, shape index: {}]
  %s1 = inlined_call_operand.vmem [shape: f32[50,4], index: 1, kind: input, shape index: {}]
  %s2 = inlined_call_operand.vmem [shape: f32[50,1], index: 2, kind: input, shape index: {}]
  %s3 = inlined_call_operand.vmem [shape: f32[50,50], index: 3, kind: input, shape index: {}]
  %s4 = inlined_call_operand.vmem [shape: f32[50,1], index: 4, kind: input, shape index: {}]
  %s5 = inlined_call_operand.vmem [shape: f32[3,50], index: 5, kind: input, shape index: {}]
  %s6 = inlined_call_operand.vmem [shape: f32[3,1], index: 6, kind: input, shape index: {}]
  %s7 = inlined_call_operand.hbm [shape: f32[3,8], index: 7, kind: output, shape index: {}]
  %s8 = sld [smem:[#allocation0]]
  $region38: #{tpu_custom_call.1} parent=0
    _
  %s10 = ssub.s32 1, %s8
  %s11 = scalar_select 0, %s10, %s8
  $region1: #{tpu_custom_call.1} parent=0
    #allocation2 [shape = 'u8[2048]{0}', space=vmem, size = 0x800, scoped, tag = 'output window, operand 0, single buffered']
    #allocation3 [shape = 's32[1]{0}', space=sflag, size = 0x4, scoped, tag = 'scoped memory for tpu_custom_call.1']
    %12 = vsyncpa [#allocation3], 0
    // Predicated region
    $region2: #{tpu_custom_call.1} parent=1 // pred_check
      _
    $region3: #{tpu_custom_call.1} parent=1 // pred_check_branch
      %14 = sbr.rel (0) target = $region5
    $region4: #{tpu_custom_call.1} parent=1 // pred_region
      _
    $region5: #{tpu_custom_call.1} parent=1 // pred_fallthru
      _
    // Predicated region
    $region6: #{tpu_custom_call.1} parent=1 // pred_check
      _
    $region7: #{tpu_custom_call.1} parent=1 // pred_check_branch
      %16 = sbr.rel (0) target = $region9
    $region8: #{tpu_custom_call.1} parent=1 // pred_region
      _
    $region9: #{tpu_custom_call.1} parent=1 // pred_fallthru
      _
    // Predicated region
    $region10: #{tpu_custom_call.1} parent=1 // pred_check
      _
    $region11: #{tpu_custom_call.1} parent=1 // pred_check_branch
      %18 = sbr.rel (0) target = $region13
    $region12: #{tpu_custom_call.1} parent=1 // pred_region
      _
    $region13: #{tpu_custom_call.1} parent=1 // pred_fallthru
      _
    // Predicated region
    $region14: #{tpu_custom_call.1} parent=1 // pred_check
      _
    $region15: #{tpu_custom_call.1} parent=1 // pred_check_branch
      %20 = sbr.rel (0) target = $region17
    $region16: #{tpu_custom_call.1} parent=1 // pred_region
      _
    $region17: #{tpu_custom_call.1} parent=1 // pred_fallthru
      _
    // Predicated region
    $region18: #{tpu_custom_call.1} parent=1 // pred_check
      _
    $region19: #{tpu_custom_call.1} parent=1 // pred_check_branch
      %22 = sbr.rel (0) target = $region21
    $region20: #{tpu_custom_call.1} parent=1 // pred_region
      _
    $region21: #{tpu_custom_call.1} parent=1 // pred_fallthru
      _
    // Predicated region
    $region22: #{tpu_custom_call.1} parent=1 // pred_check
      _
    $region23: #{tpu_custom_call.1} parent=1 // pred_check_branch
      %24 = sbr.rel (0) target = $region25
    $region24: #{tpu_custom_call.1} parent=1 // pred_region
      _
    $region25: #{tpu_custom_call.1} parent=1 // pred_fallthru
      _
    // Predicated region
    $region26: #{tpu_custom_call.1} parent=1 // pred_check
      _
    $region27: #{tpu_custom_call.1} parent=1 // pred_check_branch
      %26 = sbr.rel (0) target = $region29
    $region28: #{tpu_custom_call.1} parent=1 // pred_region
      _
    $region29: #{tpu_custom_call.1} parent=1 // pred_fallthru
      _
    %v27 = vld [vmem:[%s0] sm:$0xff]
    %v28 = vld [vmem:[%s1] sm:$0xff]
    %v29 = vld [vmem:[%s1 + $0x8] sm:$0xff]
    %v30 = vld [vmem:[%s1 + $0x10] sm:$0xff]
    %v31 = vld [vmem:[%s1 + $0x18] sm:$0xff]
    %v32 = vld [vmem:[%s1 + $0x20] sm:$0xff]
    %v33 = vld [vmem:[%s1 + $0x28] sm:$0xff]
    %v34 = vld [vmem:[%s1 + $0x30] sm:$0x3]
    %v35 = vld [vmem:[%s2] sm:$0xff]
    %v36 = vld [vmem:[%s2 + $0x8] sm:$0xff]
    %v37 = vld [vmem:[%s2 + $0x10] sm:$0xff]
    %v38 = vld [vmem:[%s2 + $0x18] sm:$0xff]
    %v39 = vld [vmem:[%s2 + $0x20] sm:$0xff]
    %v40 = vld [vmem:[%s2 + $0x28] sm:$0xff]
    %v41 = vld [vmem:[%s2 + $0x30] sm:$0x3]
    %43 = vset.pattern.permute.xlu0 0
    %44 = vperm.xlu0 %43, %v35
    %v45 = vpop.permute.xlu0 %44
    %48 = vset.pattern.permute.xlu0 0
    %49 = vperm.xlu0 %48, %v36
    %v50 = vpop.permute.xlu0 %49
    %53 = vset.pattern.permute.xlu0 0
    %54 = vperm.xlu0 %53, %v37
    %v55 = vpop.permute.xlu0 %54
    %58 = vset.pattern.permute.xlu0 0
    %59 = vperm.xlu0 %58, %v38
    %v60 = vpop.permute.xlu0 %59
    %63 = vset.pattern.permute.xlu0 0
    %64 = vperm.xlu0 %63, %v39
    %v65 = vpop.permute.xlu0 %64
    %68 = vset.pattern.permute.xlu0 0
    %69 = vperm.xlu0 %68, %v40
    %v70 = vpop.permute.xlu0 %69
    %73 = vset.pattern.permute.xlu0 0
    %74 = vperm.xlu0 %73, %v41
    %v75 = vpop.permute.xlu0 %74
    %vm77 = vcmask 31744
    %v79 = vsel %vm77, %v28, 0
    %v82 = vsel %vm77, %v29, 0
    %v85 = vsel %vm77, %v30, 0
    %v88 = vsel %vm77, %v31, 0
    %v91 = vsel %vm77, %v32, 0
    %v94 = vsel %vm77, %v33, 0
    %v97 = vsel %vm77, %v34, 0
    %v100 = vsel %vm77, %v27, 0
    %102 = vmatprep.subr.mxu0 0.0
    %103 = vmatpush1.xpose.msra.mxu0 %v100
    %104 = vmatprep.subr.mxu0 0.0
    %105 = vmatpush1.xpose.msra.mxu0 0.0
    %106 = vmatprep.subr.mxu0 0.0
    %107 = vmatpush1.xpose.msra.mxu0 0.0
    %108 = vmatprep.subr.mxu0 0.0
    %109 = vmatpush1.xpose.msra.mxu0 0.0
    %110 = vmatprep.subr.mxu0 0.0
    %111 = vmatpush1.xpose.msra.mxu0 0.0
    %112 = vmatprep.subr.mxu0 0.0
    %113 = vmatpush1.xpose.msra.mxu0 0.0
    %114 = vmatprep.subr.mxu0 0.0
    %115 = vmatpush1.xpose.msra.mxu0 0.0
    %116 = vmatprep.subr.mxu0 0.0
    %117 = vmatpush1.xpose.msra.mxu0 0.0
    %118 = vmatprep.subr.mxu0 0.0
    %119 = vmatpush1.xpose.msra.mxu0 0.0
    %120 = vmatprep.subr.mxu0 0.0
    %121 = vmatpush1.xpose.msra.mxu0 0.0
    %122 = vmatprep.subr.mxu0 0.0
    %123 = vmatpush1.xpose.msra.mxu0 0.0
    %124 = vmatprep.subr.mxu0 0.0
    %125 = vmatpush1.xpose.msra.mxu0 0.0
    %126 = vmatprep.subr.mxu0 0.0
    %127 = vmatpush1.xpose.msra.mxu0 0.0
    %128 = vmatprep.subr.mxu0 0.0
    %129 = vmatpush1.xpose.msra.mxu0 0.0
    %130 = vmatprep.subr.mxu0 0.0
    %131 = vmatpush1.xpose.msra.mxu0 0.0
    %132 = vmatprep.subr.mxu0 0.0
    %133 = vmatpush1.xpose.msra.mxu0 0.0
    %134 = vmatprep.subr.mxu0 0.0
    %135 = vmatpush1.xpose.msra.mxu0 0.0
    %136 = vmatprep.subr.mxu0 0.0
    %137 = vmatpush1.xpose.msra.mxu0 0.0
    %138 = vmatprep.subr.mxu0 0.0
    %139 = vmatpush1.xpose.msra.mxu0 0.0
    %140 = vmatprep.subr.mxu0 0.0
    %141 = vmatpush1.xpose.msra.mxu0 0.0
    %142 = vmatprep.subr.mxu0 0.0
    %143 = vmatpush1.xpose.msra.mxu0 0.0
    %144 = vmatprep.subr.mxu0 0.0
    %145 = vmatpush1.xpose.msra.mxu0 0.0
    %146 = vmatprep.subr.mxu0 0.0
    %147 = vmatpush1.xpose.msra.mxu0 0.0
    %148 = vmatprep.subr.mxu0 0.0
    %149 = vmatpush1.xpose.msra.mxu0 0.0
    %150 = vmatprep.subr.mxu0 0.0
    %151 = vmatpush1.xpose.msra.mxu0 0.0
    %152 = vmatprep.subr.mxu0 0.0
    %153 = vmatpush1.xpose.msra.mxu0 0.0
    %154 = vmatprep.subr.mxu0 0.0
    %155 = vmatpush1.xpose.msra.mxu0 0.0
    %156 = vmatprep.subr.mxu0 0.0
    %157 = vmatpush1.xpose.msra.mxu0 0.0
    %158 = vmatprep.subr.mxu0 0.0
    %159 = vmatpush1.xpose.msra.mxu0 0.0
    %160 = vmatprep.subr.mxu0 0.0
    %161 = vmatpush1.xpose.msra.mxu0 0.0
    %162 = vmatprep.subr.mxu0 0.0
    %163 = vmatpush1.xpose.msra.mxu0 0.0
    %164 = vmatprep.subr.mxu0 0.0
    %165 = vmatpush1.xpose.msra.mxu0 0.0
    %166 = vmatprep.mubr.f32.mxu0 0.0
    %167 = vmatmul.mubr.f32.gmra.mrb[0].mxu0 %v79
    %v168 = vpop.f32.mrb[0].mxu0
    %v169 = vadd.f32 %v45, %v168
    %v170 = vpop.f32.mrb[0].mxu0
    %171 = vmatprep.mubr.f32.mxu0 0.0
    %172 = vmatmul.mubr.f32.gmra.mrb[0].mxu0 %v82
    %v173 = vpop.f32.mrb[0].mxu0
    %v174 = vadd.f32 %v50, %v173
    %v175 = vpop.f32.mrb[0].mxu0
    %176 = vmatprep.mubr.f32.mxu0 0.0
    %177 = vmatmul.mubr.f32.gmra.mrb[0].mxu0 %v85
    %v178 = vpop.f32.mrb[0].mxu0
    %v179 = vadd.f32 %v55, %v178
    %v180 = vpop.f32.mrb[0].mxu0
    %181 = vmatprep.mubr.f32.mxu0 0.0
    %182 = vmatmul.mubr.f32.gmra.mrb[0].mxu0 %v88
    %v183 = vpop.f32.mrb[0].mxu0
    %v184 = vadd.f32 %v60, %v183
    %v185 = vpop.f32.mrb[0].mxu0
    %186 = vmatprep.mubr.f32.mxu0 0.0
    %187 = vmatmul.mubr.f32.gmra.mrb[0].mxu0 %v91
    %v188 = vpop.f32.mrb[0].mxu0
    %v189 = vadd.f32 %v65, %v188
    %v190 = vpop.f32.mrb[0].mxu0
    %191 = vmatprep.mubr.f32.mxu0 0.0
    %192 = vmatmul.mubr.f32.gmra.mrb[0].mxu0 %v94
    %v193 = vpop.f32.mrb[0].mxu0
    %v194 = vadd.f32 %v70, %v193
    %v195 = vpop.f32.mrb[0].mxu0
    %196 = vmatprep.mubr.f32.mxu0 0.0
    %197 = vmatmul.mubr.f32.gmra.mrb[0].mxu0 %v97
    %v198 = vpop.f32.mrb[0].mxu0
    %v199 = vadd.f32 %v75, %v198
    %v200 = vpop.f32.mrb[0].mxu0
    %201 = vdwg.mxu0
    %v202 = vmax.f32 %v169, 0.0
    %v203 = vmax.f32 %v174, 0.0
    %v204 = vmax.f32 %v179, 0.0
    %v205 = vmax.f32 %v184, 0.0
    %v206 = vmax.f32 %v189, 0.0
    %v207 = vmax.f32 %v194, 0.0
    %v208 = vmax.f32 %v199, 0.0
    %v209 = vld [vmem:[%s3] sm:$0xff]
    %v210 = vld [vmem:[%s3 + $0x8] sm:$0xff]
    %v211 = vld [vmem:[%s3 + $0x10] sm:$0xff]
    %v212 = vld [vmem:[%s3 + $0x18] sm:$0xff]
    %v213 = vld [vmem:[%s3 + $0x20] sm:$0xff]
    %v214 = vld [vmem:[%s3 + $0x28] sm:$0xff]
    %v215 = vld [vmem:[%s3 + $0x30] sm:$0x3]
    %v216 = vld [vmem:[%s4] sm:$0xff]
    %v217 = vld [vmem:[%s4 + $0x8] sm:$0xff]
    %v218 = vld [vmem:[%s4 + $0x10] sm:$0xff]
    %v219 = vld [vmem:[%s4 + $0x18] sm:$0xff]
    %v220 = vld [vmem:[%s4 + $0x20] sm:$0xff]
    %v221 = vld [vmem:[%s4 + $0x28] sm:$0xff]
    %v222 = vld [vmem:[%s4 + $0x30] sm:$0x3]
    %224 = vset.pattern.permute.xlu0 0
    %225 = vperm.xlu0 %224, %v216
    %v226 = vpop.permute.xlu0 %225
    %229 = vset.pattern.permute.xlu0 0
    %230 = vperm.xlu0 %229, %v217
    %v231 = vpop.permute.xlu0 %230
    %234 = vset.pattern.permute.xlu0 0
    %235 = vperm.xlu0 %234, %v218
    %v236 = vpop.permute.xlu0 %235
    %239 = vset.pattern.permute.xlu0 0
    %240 = vperm.xlu0 %239, %v219
    %v241 = vpop.permute.xlu0 %240
    %244 = vset.pattern.permute.xlu0 0
    %245 = vperm.xlu0 %244, %v220
    %v246 = vpop.permute.xlu0 %245
    %249 = vset.pattern.permute.xlu0 0
    %250 = vperm.xlu0 %249, %v221
    %v251 = vpop.permute.xlu0 %250
    %254 = vset.pattern.permute.xlu0 0
    %255 = vperm.xlu0 %254, %v222
    %v256 = vpop.permute.xlu0 %255
    %vm258 = vcmask 408576
    %v260 = vsel %vm258, %v209, 0
    %v263 = vsel %vm258, %v210, 0
    %v266 = vsel %vm258, %v211, 0
    %v269 = vsel %vm258, %v212, 0
    %v272 = vsel %vm258, %v213, 0
    %v275 = vsel %vm258, %v214, 0
    %v278 = vsel %vm258, %v215, 0
    %vm280 = vcmask 1041408
    %v282 = vsel %vm280, %v208, 0
    %284 = vmatprep.subr.mxu0 0.0
    %285 = vmatpush1.msra.mxu0 %v202
    %286 = vmatprep.subr.mxu0 0.0
    %287 = vmatpush1.msra.mxu0 %v203
    %288 = vmatprep.subr.mxu0 0.0
    %289 = vmatpush1.msra.mxu0 %v204
    %290 = vmatprep.subr.mxu0 0.0
    %291 = vmatpush1.msra.mxu0 %v205
    %292 = vmatprep.subr.mxu0 0.0
    %293 = vmatpush1.msra.mxu0 %v206
    %294 = vmatprep.subr.mxu0 0.0
    %295 = vmatpush1.msra.mxu0 %v207
    %296 = vmatprep.subr.mxu0 0.0
    %297 = vmatpush1.msra.mxu0 %v282
    %298 = vmatprep.subr.mxu0 0.0
    %299 = vmatpush1.msra.mxu0 0.0
    %300 = vmatprep.subr.mxu0 0.0
    %301 = vmatpush1.msra.mxu0 0.0
    %302 = vmatprep.subr.mxu0 0.0
    %303 = vmatpush1.msra.mxu0 0.0
    %304 = vmatprep.subr.mxu0 0.0
    %305 = vmatpush1.msra.mxu0 0.0
    %306 = vmatprep.subr.mxu0 0.0
    %307 = vmatpush1.msra.mxu0 0.0
    %308 = vmatprep.subr.mxu0 0.0
    %309 = vmatpush1.msra.mxu0 0.0
    %310 = vmatprep.subr.mxu0 0.0
    %311 = vmatpush1.msra.mxu0 0.0
    %312 = vmatprep.subr.mxu0 0.0
    %313 = vmatpush1.msra.mxu0 0.0
    %314 = vmatprep.subr.mxu0 0.0
    %315 = vmatpush1.msra.mxu0 0.0
    %316 = vmatprep.subr.mxu0 0.0
    %317 = vmatpush1.msra.mxu0 0.0
    %318 = vmatprep.subr.mxu0 0.0
    %319 = vmatpush1.msra.mxu0 0.0
    %320 = vmatprep.subr.mxu0 0.0
    %321 = vmatpush1.msra.mxu0 0.0
    %322 = vmatprep.subr.mxu0 0.0
    %323 = vmatpush1.msra.mxu0 0.0
    %324 = vmatprep.subr.mxu0 0.0
    %325 = vmatpush1.msra.mxu0 0.0
    %326 = vmatprep.subr.mxu0 0.0
    %327 = vmatpush1.msra.mxu0 0.0
    %328 = vmatprep.subr.mxu0 0.0
    %329 = vmatpush1.msra.mxu0 0.0
    %330 = vmatprep.subr.mxu0 0.0
    %331 = vmatpush1.msra.mxu0 0.0
    %332 = vmatprep.subr.mxu0 0.0
    %333 = vmatpush1.msra.mxu0 0.0
    %334 = vmatprep.subr.mxu0 0.0
    %335 = vmatpush1.msra.mxu0 0.0
    %336 = vmatprep.subr.mxu0 0.0
    %337 = vmatpush1.msra.mxu0 0.0
    %338 = vmatprep.subr.mxu0 0.0
    %339 = vmatpush1.msra.mxu0 0.0
    %340 = vmatprep.subr.mxu0 0.0
    %341 = vmatpush1.msra.mxu0 0.0
    %342 = vmatprep.subr.mxu0 0.0
    %343 = vmatpush1.msra.mxu0 0.0
    %344 = vmatprep.subr.mxu0 0.0
    %345 = vmatpush1.msra.mxu0 0.0
    %346 = vmatprep.subr.mxu0 0.0
    %347 = vmatpush1.msra.mxu0 0.0
    %348 = vmatprep.mubr.f32.mxu0 0.0
    %349 = vmatmul.mubr.f32.gmra.mrb[0].mxu0 %v260
    %v350 = vpop.f32.mrb[0].mxu0
    %v351 = vadd.f32 %v226, %v350
    %v352 = vpop.f32.mrb[0].mxu0
    %353 = vmatprep.mubr.f32.mxu0 0.0
    %354 = vmatmul.mubr.f32.gmra.mrb[0].mxu0 %v263
    %v355 = vpop.f32.mrb[0].mxu0
    %v356 = vadd.f32 %v231, %v355
    %v357 = vpop.f32.mrb[0].mxu0
    %358 = vmatprep.mubr.f32.mxu0 0.0
    %359 = vmatmul.mubr.f32.gmra.mrb[0].mxu0 %v266
    %v360 = vpop.f32.mrb[0].mxu0
    %v361 = vadd.f32 %v236, %v360
    %v362 = vpop.f32.mrb[0].mxu0
    %363 = vmatprep.mubr.f32.mxu0 0.0
    %364 = vmatmul.mubr.f32.gmra.mrb[0].mxu0 %v269
    %v365 = vpop.f32.mrb[0].mxu0
    %v366 = vadd.f32 %v241, %v365
    %v367 = vpop.f32.mrb[0].mxu0
    %368 = vmatprep.mubr.f32.mxu0 0.0
    %369 = vmatmul.mubr.f32.gmra.mrb[0].mxu0 %v272
    %v370 = vpop.f32.mrb[0].mxu0
    %v371 = vadd.f32 %v246, %v370
    %v372 = vpop.f32.mrb[0].mxu0
    %373 = vmatprep.mubr.f32.mxu0 0.0
    %374 = vmatmul.mubr.f32.gmra.mrb[0].mxu0 %v275
    %v375 = vpop.f32.mrb[0].mxu0
    %v376 = vadd.f32 %v251, %v375
    %v377 = vpop.f32.mrb[0].mxu0
    %378 = vmatprep.mubr.f32.mxu0 0.0
    %379 = vmatmul.mubr.f32.gmra.mrb[0].mxu0 %v278
    %v380 = vpop.f32.mrb[0].mxu0
    %v381 = vadd.f32 %v256, %v380
    %v382 = vpop.f32.mrb[0].mxu0
    %383 = vdwg.mxu0
    %v384 = vmax.f32 %v351, 0.0
    %v385 = vmax.f32 %v356, 0.0
    %v386 = vmax.f32 %v361, 0.0
    %v387 = vmax.f32 %v366, 0.0
    %v388 = vmax.f32 %v371, 0.0
    %v389 = vmax.f32 %v376, 0.0
    %v390 = vmax.f32 %v381, 0.0
    %v391 = vld [vmem:[%s5] sm:$0x7]
    %v392 = vld [vmem:[%s6] sm:$0x7]
    %394 = vset.pattern.permute.xlu0 0
    %395 = vperm.xlu0 %394, %v392
    %v396 = vpop.permute.xlu0 %395
    %v399 = vsel %vm258, %v391, 0
    %v402 = vsel %vm280, %v390, 0
    %404 = vmatprep.subr.mxu0 0.0
    %405 = vmatpush1.msra.mxu0 %v384
    %406 = vmatprep.subr.mxu0 0.0
    %407 = vmatpush1.msra.mxu0 %v385
    %408 = vmatprep.subr.mxu0 0.0
    %409 = vmatpush1.msra.mxu0 %v386
    %410 = vmatprep.subr.mxu0 0.0
    %411 = vmatpush1.msra.mxu0 %v387
    %412 = vmatprep.subr.mxu0 0.0
    %413 = vmatpush1.msra.mxu0 %v388
    %414 = vmatprep.subr.mxu0 0.0
    %415 = vmatpush1.msra.mxu0 %v389
    %416 = vmatprep.subr.mxu0 0.0
    %417 = vmatpush1.msra.mxu0 %v402
    %418 = vmatprep.subr.mxu0 0.0
    %419 = vmatpush1.msra.mxu0 0.0
    %420 = vmatprep.subr.mxu0 0.0
    %421 = vmatpush1.msra.mxu0 0.0
    %422 = vmatprep.subr.mxu0 0.0
    %423 = vmatpush1.msra.mxu0 0.0
    %424 = vmatprep.subr.mxu0 0.0
    %425 = vmatpush1.msra.mxu0 0.0
    %426 = vmatprep.subr.mxu0 0.0
    %427 = vmatpush1.msra.mxu0 0.0
    %428 = vmatprep.subr.mxu0 0.0
    %429 = vmatpush1.msra.mxu0 0.0
    %430 = vmatprep.subr.mxu0 0.0
    %431 = vmatpush1.msra.mxu0 0.0
    %432 = vmatprep.subr.mxu0 0.0
    %433 = vmatpush1.msra.mxu0 0.0
    %434 = vmatprep.subr.mxu0 0.0
    %435 = vmatpush1.msra.mxu0 0.0
    %436 = vmatprep.subr.mxu0 0.0
    %437 = vmatpush1.msra.mxu0 0.0
    %438 = vmatprep.subr.mxu0 0.0
    %439 = vmatpush1.msra.mxu0 0.0
    %440 = vmatprep.subr.mxu0 0.0
    %441 = vmatpush1.msra.mxu0 0.0
    %442 = vmatprep.subr.mxu0 0.0
    %443 = vmatpush1.msra.mxu0 0.0
    %444 = vmatprep.subr.mxu0 0.0
    %445 = vmatpush1.msra.mxu0 0.0
    %446 = vmatprep.subr.mxu0 0.0
    %447 = vmatpush1.msra.mxu0 0.0
    %448 = vmatprep.subr.mxu0 0.0
    %449 = vmatpush1.msra.mxu0 0.0
    %450 = vmatprep.subr.mxu0 0.0
    %451 = vmatpush1.msra.mxu0 0.0
    %452 = vmatprep.subr.mxu0 0.0
    %453 = vmatpush1.msra.mxu0 0.0
    %454 = vmatprep.subr.mxu0 0.0
    %455 = vmatpush1.msra.mxu0 0.0
    %456 = vmatprep.subr.mxu0 0.0
    %457 = vmatpush1.msra.mxu0 0.0
    %458 = vmatprep.subr.mxu0 0.0
    %459 = vmatpush1.msra.mxu0 0.0
    %460 = vmatprep.subr.mxu0 0.0
    %461 = vmatpush1.msra.mxu0 0.0
    %462 = vmatprep.subr.mxu0 0.0
    %463 = vmatpush1.msra.mxu0 0.0
    %464 = vmatprep.subr.mxu0 0.0
    %465 = vmatpush1.msra.mxu0 0.0
    %466 = vmatprep.subr.mxu0 0.0
    %467 = vmatpush1.msra.mxu0 0.0
    %468 = vmatprep.mubr.f32.mxu0 0.0
    %469 = vmatmul.mubr.f32.gmra.mrb[0].mxu0 %v399
    %v470 = vpop.f32.mrb[0].mxu0
    %v471 = vadd.f32 %v396, %v470
    %v472 = vpop.f32.mrb[0].mxu0
    %473 = vdwg.mxu0
    %vm474 = vcmask 59392
    %v475 = vsel %vm474, %v471, -inf
    %v476 = vrot.slane %v475, 4
    %v477 = vmax.f32 %v475, %v476
    %v478 = vrot.slane %v477, 2
    %v479 = vmax.f32 %v477, %v478
    %v480 = vrot.slane %v479, 1
    %v481 = vmax.f32 %v479, %v480
    %v482 = vsub.f32 %v471, %v481
    %v483 = vmul.f32 %v482, 1.442695
    %v484 = vpow.pop %v483
    %v485 = vsel %vm474, %v484, 0.0
    %v486 = vrot.slane %v485, 4
    %v487 = vadd.f32 %v485, %v486
    %v488 = vrot.slane %v487, 2
    %v489 = vadd.f32 %v487, %v488
    %v490 = vrot.slane %v489, 1
    %v491 = vadd.f32 %v489, %v490
    %v492 = vlog2.pop %v491
    %v493 = vmul.f32 %v492, 0.6931472
    %v494 = vsub.f32 %v482, %v493
    %495 = vst.msk [vmem:[#allocation2] sm:$0x7] %vm474, %v494
    // Predicated region
    $region30: #{tpu_custom_call.1} parent=1 // pred_check
      _
    $region31: #{tpu_custom_call.1} parent=1 // pred_check_branch
      %497 = sbr.rel (0) target = $region33
    $region32: #{tpu_custom_call.1} parent=1 // pred_region
      %s499 = ssub.s32 64, 64
      %500 = vsyncadd [#allocation3], %s499
      %s502 = sshll.u32 [#allocation2], 4
      %s503 = int_to_ptr.vmem [resolvable:$true] %s502
      %505 = dma.vmem_to_hbm [thread:$0]  %s503, 64, %s7, [#allocation3]
    $region33: #{tpu_custom_call.1} parent=1 // pred_fallthru
      _
    // Predicated region
    $region34: #{tpu_custom_call.1} parent=1 // pred_check
      _
    $region35: #{tpu_custom_call.1} parent=1 // pred_check_branch
      %507 = sbr.rel (0) target = $region37
    $region36: #{tpu_custom_call.1} parent=1 // pred_region
      %508 = dma.done [#allocation3], 64
    $region37: #{tpu_custom_call.1} parent=1 // pred_fallthru
      _
    %509 = vsyncpa [#allocation3], 1

</llo_original>
